<compile_context>
chip_gen: v7x
topology: tpu7x:2x2x1
jax: 0.10.0
libtpu: 0.0.40
codegen_flags: <defaults>
</compile_context>

<pallas_src>
import functools

import jax
import jax.numpy as jnp
from jax import lax
from jax.experimental import pallas as pl
from jax.experimental.pallas import tpu as pltpu


def _dice_partial_kernel(x_ref, t_ref, o_ref, acc_i_ref, acc_d_ref, *,
                         n_valid, tm, lane, steps_per_core, need_mask):
    j = pl.program_id(1)

    @pl.when(j == 0)
    def _init():
        acc_i_ref[...] = jnp.zeros_like(acc_i_ref)
        acc_d_ref[...] = jnp.zeros_like(acc_d_ref)

    x = jax.nn.sigmoid(x_ref[...].astype(jnp.float32))
    t = t_ref[...].astype(jnp.float32)

    if need_mask:
        # Mask lane-tail padding and out-of-bounds rows of boundary tiles.
        # Uses the *logical* tile index, so it also zeroes fully-OOB tiles
        # (whose index_map block index is clamped in the wrapper).
        c = pl.program_id(0)
        tile = c * steps_per_core + j
        base = tile * (tm * lane)
        rid = lax.broadcasted_iota(jnp.int32, (tm, lane), 0)
        lid = lax.broadcasted_iota(jnp.int32, (tm, lane), 1)
        valid = (base + rid * lane + lid) < n_valid
        x = jnp.where(valid, x, 0.0)
        t = jnp.where(valid, t, 0.0)

    acc_i_ref[...] += x * t          # partial sums of sigmoid(x) * t
    acc_d_ref[...] += x + t          # partial sums of sigmoid(x) + t

    @pl.when(j == steps_per_core - 1)
    def _finalize():
        o_ref[0, 0] = jnp.sum(acc_i_ref[...])
        o_ref[0, 1] = jnp.sum(acc_d_ref[...])


def dice_loss(inputs, targets, smooth=1.0, *, tm=2048):
    """Pallas implementation of DiceLoss.forward (returns a scalar f32)."""
    lane = 128
    n = inputs.size

    x_flat = inputs.reshape(-1)
    t_flat = targets.reshape(-1)

    # Stream native float dtypes (bf16 halves HBM traffic); cast bool/int.
    if not jnp.issubdtype(x_flat.dtype, jnp.floating):
        x_flat = x_flat.astype(jnp.float32)
    if not jnp.issubdtype(t_flat.dtype, jnp.floating):
        t_flat = t_flat.astype(jnp.float32)

    # Minimal lane-tail padding (only when n % 128 != 0); padded elements are
    # masked out inside the kernel, so zero padding is fine.
    rows = pl.cdiv(n, lane)
    n_pad = rows * lane
    if n_pad != n:
        x_flat = jnp.pad(x_flat, (0, n_pad - n))
        t_flat = jnp.pad(t_flat, (0, n_pad - n))

    x2d = x_flat.reshape(rows, lane)
    t2d = t_flat.reshape(rows, lane)

    # Row-tile size: whole array if it is small, else tm (multiple of 8).
    tm_eff = tm if rows >= tm else rows
    steps_total = pl.cdiv(rows, tm_eff)
    # Leading parallel axis: work is split across TensorCores on multi-TC
    # chips (v7x / megacore); on single-TC chips this is just a serial split.
    ncores = 2 if steps_total >= 2 else 1
    steps_per_core = pl.cdiv(steps_total, ncores)
    covered = ncores * steps_per_core * tm_eff * lane
    need_mask = covered != n

    last_block = steps_total - 1

    def in_idx(c, j):
        # Clamp so boundary / fully-OOB tiles never DMA past the array; the
        # in-kernel mask (based on the logical tile index) zeroes their
        # contribution.
        return (jnp.minimum(c * steps_per_core + j, last_block), 0)

    kernel = functools.partial(
        _dice_partial_kernel,
        n_valid=n, tm=tm_eff, lane=lane,
        steps_per_core=steps_per_core, need_mask=need_mask)

    partials = pl.pallas_call(
        kernel,
        out_shape=jax.ShapeDtypeStruct((ncores, 2), jnp.float32),
        grid_spec=pltpu.PrefetchScalarGridSpec(
            num_scalar_prefetch=0,
            grid=(ncores, steps_per_core),
            in_specs=[
                pl.BlockSpec((tm_eff, lane), in_idx),
                pl.BlockSpec((tm_eff, lane), in_idx),
            ],
            out_specs=pl.BlockSpec((1, 2), lambda c, j: (c, 0),
                                   memory_space=pltpu.SMEM),
            scratch_shapes=[
                pltpu.VMEM((tm_eff, lane), jnp.float32),
                pltpu.VMEM((tm_eff, lane), jnp.float32),
            ],
        ),
        compiler_params=pltpu.CompilerParams(
            dimension_semantics=("parallel", "arbitrary"),
        ),
    )(x2d, t2d)

    # Tiny scalar epilogue in plain JAX: combine per-core partials.
    intersection = jnp.sum(partials[:, 0])
    denom = jnp.sum(partials[:, 1])
    smooth = jnp.float32(smooth)
    dice = (2.0 * intersection + smooth) / (denom + smooth)
    return (1.0 - dice).astype(jnp.float32)


def _dice_loss_ref(inputs, targets, smooth=1.0):
    x = jax.nn.sigmoid(inputs.astype(jnp.float32)).reshape(-1)
    t = targets.astype(jnp.float32).reshape(-1)
    intersection = jnp.sum(x * t)
    dice = (2.0 * intersection + smooth) / (jnp.sum(x) + jnp.sum(t) + smooth)
    return 1.0 - dice


if __name__ == "__main__":
    key = jax.random.PRNGKey(0)
    k1, k2, k3, k4 = jax.random.split(key, 4)

    # Small NCHW-like shapes consistent with a segmentation head.
    B, C, H, W = 2, 4, 16, 16
    logits = jax.random.normal(k1, (B, C, H, W), dtype=jnp.float32)
    targets = (jax.random.uniform(k2, (B, C, H, W)) > 0.5).astype(jnp.float32)

    loss = jax.block_until_ready(dice_loss(logits, targets, smooth=1.0))
    ref = jax.block_until_ready(_dice_loss_ref(logits, targets, smooth=1.0))
    assert jnp.allclose(loss, ref, atol=1e-5, rtol=1e-5), (loss, ref)

    # Ragged element count (not a multiple of 128) exercises the in-kernel
    # tail masking path instead of full-size wrapper padding.
    shape2 = (2, 3, 17, 13)
    logits2 = jax.random.normal(k3, shape2, dtype=jnp.float32)
    targets2 = (jax.random.uniform(k4, shape2) > 0.5).astype(jnp.float32)

    loss2 = jax.block_until_ready(dice_loss(logits2, targets2, smooth=1.0))
    ref2 = jax.block_until_ready(_dice_loss_ref(logits2, targets2, smooth=1.0))
    assert jnp.allclose(loss2, ref2, atol=1e-5, rtol=1e-5), (loss2, ref2)

    print("KERNEL_OK")
</pallas_src>

<mosaic_0001>
module attributes {stable_mosaic.version = 11 : i64} {
  func.func @_dice_partial_kernel(%arg0: i32, %arg1: i32, %arg2: memref<16x128xf32, #tpu.memory_space<vmem>>, %arg3: memref<16x128xf32, #tpu.memory_space<vmem>>, %arg4: memref<1x2xf32, #tpu.memory_space<smem>>, %arg5: memref<16x128xf32, #tpu.memory_space<vmem>>, %arg6: memref<16x128xf32, #tpu.memory_space<vmem>>) attributes {dimension_semantics = [#tpu.dimension_semantics<parallel>, #tpu.dimension_semantics<arbitrary>], iteration_bounds = array<i64: 1, 1>, scalar_prefetch = 0 : i64, scratch_operands = 2 : i64, tpu.core_type = #tpu.core_type<tc>, window_params = [{transform_indices = @transform_0, window_bounds = array<i64: 16, 128>}, {transform_indices = @transform_1, window_bounds = array<i64: 16, 128>}, {transform_indices = @transform_2, window_bounds = array<i64: 1, 2>}]} {
    %c0_i32 = arith.constant 0 : i32
    %0 = arith.cmpi eq, %arg1, %c0_i32 : i32
    %1 = arith.extui %0 : i1 to i32
    %c0_i32_0 = arith.constant 0 : i32
    %2 = arith.cmpi ne, %1, %c0_i32_0 : i32
    scf.if %2 {
      %cst_14 = arith.constant 0.000000e+00 : f32
      %21 = vector.broadcast %cst_14 : f32 to vector<16x128xf32>
      %c0_15 = arith.constant 0 : index
      %c0_16 = arith.constant 0 : index
      %22 = vector.load %arg5[%c0_15, %c0_16] : memref<16x128xf32, #tpu.memory_space<vmem>>, vector<16x128xf32>
      tpu.vector_store %arg5[%c0_15, %c0_16], %21 {strides = array<i32>} : memref<16x128xf32, #tpu.memory_space<vmem>>, vector<16x128xf32>,
      %cst_17 = arith.constant 0.000000e+00 : f32
      %23 = vector.broadcast %cst_17 : f32 to vector<16x128xf32>
      %c0_18 = arith.constant 0 : index
      %c0_19 = arith.constant 0 : index
      %24 = vector.load %arg6[%c0_18, %c0_19] : memref<16x128xf32, #tpu.memory_space<vmem>>, vector<16x128xf32>
      tpu.vector_store %arg6[%c0_18, %c0_19], %23 {strides = array<i32>} : memref<16x128xf32, #tpu.memory_space<vmem>>, vector<16x128xf32>,
    } else {
    }
    %c0 = arith.constant 0 : index
    %c0_1 = arith.constant 0 : index
    %3 = vector.load %arg2[%c0, %c0_1] : memref<16x128xf32, #tpu.memory_space<vmem>>, vector<16x128xf32>
    %4 = arith.negf %3 : vector<16x128xf32>
    %5 = math.exp %4 : vector<16x128xf32>
    %cst = arith.constant 1.000000e+00 : f32
    %6 = vector.broadcast %cst : f32 to vector<16x128xf32>
    %7 = arith.addf %6, %5 : vector<16x128xf32>
    %8 = arith.divf %6, %7 : vector<16x128xf32>
    %c0_2 = arith.constant 0 : index
    %c0_3 = arith.constant 0 : index
    %9 = vector.load %arg3[%c0_2, %c0_3] : memref<16x128xf32, #tpu.memory_space<vmem>>, vector<16x128xf32>
    %c0_4 = arith.constant 0 : index
    %c0_5 = arith.constant 0 : index
    %10 = vector.load %arg5[%c0_4, %c0_5] : memref<16x128xf32, #tpu.memory_space<vmem>>, vector<16x128xf32>
    %11 = arith.mulf %8, %9 : vector<16x128xf32>
    %12 = arith.addf %10, %11 : vector<16x128xf32>
    %c0_6 = arith.constant 0 : index
    %c0_7 = arith.constant 0 : index
    %13 = vector.load %arg5[%c0_6, %c0_7] : memref<16x128xf32, #tpu.memory_space<vmem>>, vector<16x128xf32>
    tpu.vector_store %arg5[%c0_6, %c0_7], %12 {strides = array<i32>} : memref<16x128xf32, #tpu.memory_space<vmem>>, vector<16x128xf32>,
    %c0_8 = arith.constant 0 : index
    %c0_9 = arith.constant 0 : index
    %14 = vector.load %arg6[%c0_8, %c0_9] : memref<16x128xf32, #tpu.memory_space<vmem>>, vector<16x128xf32>
    %15 = arith.addf %8, %9 : vector<16x128xf32>
    %16 = arith.addf %14, %15 : vector<16x128xf32>
    %c0_10 = arith.constant 0 : index
    %c0_11 = arith.constant 0 : index
    %17 = vector.load %arg6[%c0_10, %c0_11] : memref<16x128xf32, #tpu.memory_space<vmem>>, vector<16x128xf32>
    tpu.vector_store %arg6[%c0_10, %c0_11], %16 {strides = array<i32>} : memref<16x128xf32, #tpu.memory_space<vmem>>, vector<16x128xf32>,
    %c0_i32_12 = arith.constant 0 : i32
    %18 = arith.cmpi eq, %arg1, %c0_i32_12 : i32
    %19 = arith.extui %18 : i1 to i32
    %c0_i32_13 = arith.constant 0 : i32
    %20 = arith.cmpi ne, %19, %c0_i32_13 : i32
    scf.if %20 {
      %c0_14 = arith.constant 0 : index
      %c0_15 = arith.constant 0 : index
      %21 = vector.load %arg5[%c0_14, %c0_15] : memref<16x128xf32, #tpu.memory_space<vmem>>, vector<16x128xf32>
      %22 = vector.shape_cast %21 : vector<16x128xf32> to vector<1x16x128xf32>
      %cst_16 = arith.constant dense<0.000000e+00> : vector<1xf32>
      %23 = vector.multi_reduction <add>, %22, %cst_16 [1, 2] : vector<1x16x128xf32> to vector<1xf32>
      %24 = vector.shape_cast %23 : vector<1xf32> to vector<1x1x1xf32>
      %25 = vector.extract %24[0, 0, 0] : f32 from vector<1x1x1xf32>
      %c0_17 = arith.constant 0 : index
      %c0_18 = arith.constant 0 : index
      %26 = memref.load %arg4[%c0_17, %c0_18] : memref<1x2xf32, #tpu.memory_space<smem>>
      memref.store %25, %arg4[%c0_17, %c0_18] : memref<1x2xf32, #tpu.memory_space<smem>>
      %c0_19 = arith.constant 0 : index
      %c0_20 = arith.constant 0 : index
      %27 = vector.load %arg6[%c0_19, %c0_20] : memref<16x128xf32, #tpu.memory_space<vmem>>, vector<16x128xf32>
      %28 = vector.shape_cast %27 : vector<16x128xf32> to vector<1x16x128xf32>
      %cst_21 = arith.constant dense<0.000000e+00> : vector<1xf32>
      %29 = vector.multi_reduction <add>, %28, %cst_21 [1, 2] : vector<1x16x128xf32> to vector<1xf32>
      %30 = vector.shape_cast %29 : vector<1xf32> to vector<1x1x1xf32>
      %31 = vector.extract %30[0, 0, 0] : f32 from vector<1x1x1xf32>
      %c0_22 = arith.constant 0 : index
      %c1 = arith.constant 1 : index
      %32 = memref.load %arg4[%c0_22, %c1] : memref<1x2xf32, #tpu.memory_space<smem>>
      memref.store %31, %arg4[%c0_22, %c1] : memref<1x2xf32, #tpu.memory_space<smem>>
    } else {
    }
    return
  }
  func.func @transform_0(%arg0: i32, %arg1: i32) -> (i32, i32) {
    %c1_i32 = arith.constant 1 : i32
    %0 = arith.muli %arg0, %c1_i32 : i32
    %1 = arith.addi %0, %arg1 : i32
    %c0_i32 = arith.constant 0 : i32
    %2 = arith.minsi %1, %c0_i32 : i32
    %c0_i32_0 = arith.constant 0 : i32
    %c0_i32_1 = arith.constant 0 : i32
    return %2, %c0_i32_0 : i32, i32
  }
  func.func @transform_1(%arg0: i32, %arg1: i32) -> (i32, i32) {
    %c1_i32 = arith.constant 1 : i32
    %0 = arith.muli %arg0, %c1_i32 : i32
    %1 = arith.addi %0, %arg1 : i32
    %c0_i32 = arith.constant 0 : i32
    %2 = arith.minsi %1, %c0_i32 : i32
    %c0_i32_0 = arith.constant 0 : i32
    %c0_i32_1 = arith.constant 0 : i32
    return %2, %c0_i32_0 : i32, i32
  }
  func.func @transform_2(%arg0: i32, %arg1: i32) -> (i32, i32) {
    %c0_i32 = arith.constant 0 : i32
    %c0_i32_0 = arith.constant 0 : i32
    return %arg0, %c0_i32 : i32, i32
  }
}

</mosaic_0001>

<llo_original>
// kernel: tpu_custom_call.1
$region0: #{tpu_custom_call.1}
  #allocation0 [shape = 'u32[]', space=smem, size = 0x4, offset = 0x4, fixed_abs, tag = 'smem constant byte address 0x4 - core index']
  #allocation1 [shape = 'u32[144,128]{1,0:T(1,128)}', space=vmem, size = 0x12000, scoped, tag = 'internal scratch']
  #allocation2 [shape = 'f32[16,128]{1,0:T(8,128)}', space=vmem, size = 0x2000, scoped, tag = 'scratch operand']
  #allocation3 [shape = 'f32[16,128]{1,0:T(8,128)}', space=vmem, size = 0x2000, scoped, tag = 'scratch operand']
  %s0 = inlined_call_operand.hbm [shape: f32[16,128], index: 0, kind: input, shape index: {}]
  %s1 = inlined_call_operand.hbm [shape: f32[16,128], index: 1, kind: input, shape index: {}]
  %s2 = inlined_call_operand.hbm [shape: f32[1,2], index: 2, kind: output, shape index: {}]
  %s3 = sld [smem:[#allocation0]]
  $region34: #{tpu_custom_call.1} parent=0
    _
  %s5 = ssub.s32 1, %s3
  %s6 = scalar_select 0, %s5, %s3
  $region1: #{tpu_custom_call.1} parent=0
    #allocation4 [shape = 'u8[8192]{0}', space=vmem, size = 0x2000, scoped, tag = 'input window, operand 0, single buffered']
    #allocation5 [shape = 's32[1]{0}', space=sflag, size = 0x4, scoped, tag = 'scoped memory for tpu_custom_call.1']
    #allocation6 [shape = 's32[1]{0}', space=sflag, size = 0x4, scoped, tag = 'scoped memory for tpu_custom_call.1']
    #allocation7 [shape = 'u8[8192]{0}', space=vmem, size = 0x2000, scoped, tag = 'input window, operand 1, single buffered']
    #allocation8 [shape = 's32[1]{0}', space=sflag, size = 0x4, scoped, tag = 'scoped memory for tpu_custom_call.1']
    #allocation9 [shape = 'u8[512]{0}', space=smem, size = 0x200, scoped, tag = 'output window, operand 0, single buffered']
    %7 = vsyncpa [#allocation5], 0
    %8 = vsyncpa [#allocation8], 0
    %9 = vsyncpa [#allocation6], 0
    // Predicated region
    $region2: #{tpu_custom_call.1} parent=1 // pred_check
      _
    $region3: #{tpu_custom_call.1} parent=1 // pred_check_branch
      %11 = sbr.rel (0) target = $region5
    $region4: #{tpu_custom_call.1} parent=1 // pred_region
      %s12 = sadd.s32 0, 0
      %p13 = scmp.lt.s32.totalorder %s12, 0
      %s14 = scalar_select %p13, %s12, 0
      %s15 = smul.u32 2, %s14
      %s17 = ssub.s32 256, 256
      %18 = vsyncadd [#allocation5], %s17
      %s19 = smul.addr %s15, 128
      %s20 = scalar_lea.hbm %s0, %s19
      %s21 = sshll.u32 [#allocation4], 4
      %s22 = int_to_ptr.vmem [resolvable:$true] %s21
      %27 = dma.hbm_to_vmem [thread:$0]  %s20, 256, %s22, [#allocation5], 128, 128, 8
    $region5: #{tpu_custom_call.1} parent=1 // pred_fallthru
      _
    // Predicated region
    $region6: #{tpu_custom_call.1} parent=1 // pred_check
      _
    $region7: #{tpu_custom_call.1} parent=1 // pred_check_branch
      %29 = sbr.rel (0) target = $region9
    $region8: #{tpu_custom_call.1} parent=1 // pred_region
      %s30 = sadd.s32 0, 0
      %p31 = scmp.lt.s32.totalorder %s30, 0
      %s32 = scalar_select %p31, %s30, 0
      %s33 = smul.u32 2, %s32
      %s35 = ssub.s32 256, 256
      %36 = vsyncadd [#allocation8], %s35
      %s37 = smul.addr %s33, 128
      %s38 = scalar_lea.hbm %s1, %s37
      %s39 = sshll.u32 [#allocation7], 4
      %s40 = int_to_ptr.vmem [resolvable:$true] %s39
      %45 = dma.hbm_to_vmem [thread:$0]  %s38, 256, %s40, [#allocation8], 128, 128, 8
    $region9: #{tpu_custom_call.1} parent=1 // pred_fallthru
      _
    // Predicated region
    $region10: #{tpu_custom_call.1} parent=1 // pred_check
      _
    $region11: #{tpu_custom_call.1} parent=1 // pred_check_branch
      %47 = sbr.rel (0) target = $region13
    $region12: #{tpu_custom_call.1} parent=1 // pred_region
      %48 = dma.done [#allocation5], 256
    $region13: #{tpu_custom_call.1} parent=1 // pred_fallthru
      _
    // Predicated region
    $region14: #{tpu_custom_call.1} parent=1 // pred_check
      _
    $region15: #{tpu_custom_call.1} parent=1 // pred_check_branch
      %50 = sbr.rel (0) target = $region17
    $region16: #{tpu_custom_call.1} parent=1 // pred_region
      %51 = dma.done [#allocation8], 256
    $region17: #{tpu_custom_call.1} parent=1 // pred_fallthru
      _
    %s52 = sadd.s32 0, 0
    %p53 = scmp.lt.s32.totalorder %s52, 0
    %s54 = scalar_select %p53, %s52, 0
    %s55 = smul.u32 2, %s54
    %s56 = sadd.s32 0, 0
    %p57 = scmp.lt.s32.totalorder %s56, 0
    %s58 = scalar_select %p57, %s56, 0
    %s59 = smul.u32 2, %s58
    %p60 = scmp.eq.s32.totalorder 0, 0
    // Predicated region
    $region18: #{tpu_custom_call.1} parent=1 // pred_check
      %p61 = pneg %p60
    $region19: #{tpu_custom_call.1} parent=1 // pred_check_branch
      %63 = sbr.rel (%p61) target = $region21
    $region20: #{tpu_custom_call.1} parent=1 // pred_region
      %64 = vst [vmem:[#allocation2] sm:$0xff] 0.0
      %65 = vst [vmem:[#allocation2 + $0x8] sm:$0xff] 0.0
      %66 = vst [vmem:[#allocation3] sm:$0xff] 0.0
      %67 = vst [vmem:[#allocation3 + $0x8] sm:$0xff] 0.0
    $region21: #{tpu_custom_call.1} parent=1 // pred_fallthru
      _
    %v68 = vld [vmem:[#allocation4] sm:$0xff]
    %v69 = vld [vmem:[#allocation4 + $0x8] sm:$0xff]
    %v70 = vxor.u32 %v68, 2147483648
    %v71 = vxor.u32 %v69, 2147483648
    %v72 = vmul.f32 %v70, 1.442695
    %v73 = vpow.pop %v72
    %v74 = vmul.f32 %v71, 1.442695
    %v75 = vpow.pop %v74
    %v76 = vadd.f32 %v73, 1.0
    %v77 = vadd.f32 %v75, 1.0
    %v78 = vrcp.pop %v76
    %v79 = vmul.f32 1.0, %v78
    %v80 = vrcp.pop %v77
    %v81 = vmul.f32 1.0, %v80
    %v82 = vld [vmem:[#allocation7] sm:$0xff]
    %v83 = vld [vmem:[#allocation7 + $0x8] sm:$0xff]
    %v84 = vld [vmem:[#allocation2] sm:$0xff]
    %v85 = vld [vmem:[#allocation2 + $0x8] sm:$0xff]
    %v86 = vmul.f32 %v79, %v82
    %v87 = vmul.f32 %v81, %v83
    %v88 = vadd.f32 %v84, %v86
    %v89 = vadd.f32 %v85, %v87
    %90 = vst [vmem:[#allocation2] sm:$0xff] %v88
    %91 = vst [vmem:[#allocation2 + $0x8] sm:$0xff] %v89
    %v92 = vld [vmem:[#allocation3] sm:$0xff]
    %v93 = vld [vmem:[#allocation3 + $0x8] sm:$0xff]
    %v94 = vadd.f32 %v79, %v82
    %v95 = vadd.f32 %v81, %v83
    %v96 = vadd.f32 %v92, %v94
    %v97 = vadd.f32 %v93, %v95
    %98 = vst [vmem:[#allocation3] sm:$0xff] %v96
    %99 = vst [vmem:[#allocation3 + $0x8] sm:$0xff] %v97
    // Predicated region
    $region22: #{tpu_custom_call.1} parent=1 // pred_check
      %p100 = pneg %p60
    $region23: #{tpu_custom_call.1} parent=1 // pred_check_branch
      %102 = sbr.rel (%p100) target = $region25
    $region24: #{tpu_custom_call.1} parent=1 // pred_region
      %v103 = vld [vmem:[#allocation2] sm:$0xff]
      %v104 = vld [vmem:[#allocation2 + $0x8] sm:$0xff]
      %v105 = vadd.f32 %v103, %v104
      %106 = vadd.xlane.f32.xlu0 %v105
      %v107 = vpop.xlane.xlu0 %106
      %v108 = vrot.slane %v107, 4
      %v109 = vadd.f32 %v107, %v108
      %v110 = vrot.slane %v109, 2
      %v111 = vadd.f32 %v109, %v110
      %v112 = vrot.slane %v111, 1
      %v113 = vadd.f32 %v111, %v112
      %s114 = vtos %v113
      %s115 = scalar_lea.smem [#allocation9], 0
      %116 = sst [smem:[%s115]] %s114
      %v117 = vld [vmem:[#allocation3] sm:$0xff]
      %v118 = vld [vmem:[#allocation3 + $0x8] sm:$0xff]
      %v119 = vadd.f32 %v117, %v118
      %120 = vadd.xlane.f32.xlu0 %v119
      %v121 = vpop.xlane.xlu0 %120
      %v122 = vrot.slane %v121, 4
      %v123 = vadd.f32 %v121, %v122
      %v124 = vrot.slane %v123, 2
      %v125 = vadd.f32 %v123, %v124
      %v126 = vrot.slane %v125, 1
      %v127 = vadd.f32 %v125, %v126
      %s128 = vtos %v127
      %s129 = scalar_lea.smem [#allocation9], 1
      %130 = sst [smem:[%s129]] %s128
    $region25: #{tpu_custom_call.1} parent=1 // pred_fallthru
      _
    // Predicated region
    $region26: #{tpu_custom_call.1} parent=1 // pred_check
      _
    $region27: #{tpu_custom_call.1} parent=1 // pred_check_branch
      %132 = sbr.rel (0) target = $region29
    $region28: #{tpu_custom_call.1} parent=1 // pred_region
      %s134 = ssub.s32 16, 16
      %135 = vsyncadd [#allocation6], %s134
      %138 = dma.smem_to_hbm [#allocation9], 16, %s2, [#allocation6]
    $region29: #{tpu_custom_call.1} parent=1 // pred_fallthru
      _
    // Predicated region
    $region30: #{tpu_custom_call.1} parent=1 // pred_check
      _
    $region31: #{tpu_custom_call.1} parent=1 // pred_check_branch
      %140 = sbr.rel (0) target = $region33
    $region32: #{tpu_custom_call.1} parent=1 // pred_region
      %141 = dma.done [#allocation6], 16
    $region33: #{tpu_custom_call.1} parent=1 // pred_fallthru
      _
    %142 = sfence
    %143 = vsyncpa [#allocation5], 1
    %144 = vsyncpa [#allocation8], 1
    %145 = vsyncpa [#allocation6], 1

</llo_original>
